<compile_context>
chip_gen: v5e
topology: v5e:2x2
jax: 0.10.0
libtpu: 0.0.40
codegen_flags: <defaults>
</compile_context>

<pallas_src>
import jax
import jax.numpy as jnp
from jax.experimental import pallas as pl
from jax.experimental.pallas import tpu as pltpu


# --------------------------------------------------------------------------
# generation-aware budgets
# --------------------------------------------------------------------------
def _tpu_params():
    vmem_bytes = 128 * 1024 * 1024
    chip = ""
    try:
        info = pltpu.get_tpu_info()
        vmem_bytes = int(getattr(info, "vmem_capacity_bytes", vmem_bytes))
        chip = str(getattr(info, "chip_version", ""))
    except Exception:
        pass
    if vmem_bytes <= 64 * 1024 * 1024:
        # v7x-class: half the VMEM but ~2.3x HBM BW -> largest tile that still fits 64 MiB.
        vmem_limit = 44 * 1024 * 1024
        tile_budget = 4 * 1024 * 1024
    else:
        # v5e / v6e: 128 MiB physical VMEM -> grow tiles to amortise the ~0.35us/step tax.
        vmem_limit = 80 * 1024 * 1024
        tile_budget = 6 * 1024 * 1024
    # VPU/MXU crossover: v6e/v7x MXUs are 256-deep -> the rank-1 VPU path wins for a wider
    # range of Cin than on v5e's 128-deep MXU.
    vpu_max_cin = 16 if "5" in chip else 32
    return vmem_limit, tile_budget, vpu_max_cin


def _pick_lane_tile(hwp, ck, cin, tile_budget, max_lane_tile=4096):
    """Largest multiple-of-128 divisor of hwp within the per-step VMEM tile budget.

    hwp must be a multiple of 128.  Budget accounts for the double-buffered x tile plus
    the y/output tile (and its double buffer in kernel 2).
    """
    per_lane_bytes = 4 * (2 * cin + 3 * ck)
    budget_tl = max(128, (tile_budget // per_lane_bytes) // 128 * 128)
    tl = min(hwp, max_lane_tile, budget_tl)
    tl = max(128, (tl // 128) * 128)
    while hwp % tl != 0:
        tl -= 128
    return tl


def _pick_chunk(tl):
    """Lane-chunk for the rank-1 VPU path (bounds the live f32 accumulator to ~16 vregs)."""
    for c in (512, 384, 256, 128):
        if tl % c == 0:
            return c
    return tl


# --------------------------------------------------------------------------
# Kernel 1: transposed-conv core, emitting ONLY BatchNorm partial statistics.
#           (sum, sumsq) accumulated in VMEM scratch across the j ("arbitrary") axis,
#           flushed to the per-sample output block at the last j step.
# --------------------------------------------------------------------------
def _make_stats_kernel(use_mxu, tl, chunk):
    def kernel(x_ref, w_ref, stats_ref, acc_ref):
        # x_ref: [Cin, TL]; w_ref: [CK, Cin]; stats_ref/acc_ref: [CK, 2]
        j = pl.program_id(1)

        @pl.when(j == 0)
        def _init():
            acc_ref[...] = jnp.zeros_like(acc_ref)

        if use_mxu:
            y = jnp.dot(w_ref[...].astype(jnp.bfloat16),
                        x_ref[...].astype(jnp.bfloat16),
                        preferred_element_type=jnp.float32)
            s = jnp.sum(y, axis=1, keepdims=True)
            ss = jnp.sum(y * y, axis=1, keepdims=True)
        else:
            # Tiny contraction dim: rank-1 broadcast-FMA updates on the VPU, chunked over
            # lanes so the live accumulator stays well inside the register file.
            w = w_ref[...]
            cin = x_ref.shape[0]
            ck = w_ref.shape[0]
            s = jnp.zeros((ck, 1), jnp.float32)
            ss = jnp.zeros((ck, 1), jnp.float32)
            for c0 in range(0, tl, chunk):
                x = x_ref[:, c0:c0 + chunk]
                y = w[:, 0:1] * x[0:1, :]
                for k in range(1, cin):
                    y = y + w[:, k:k + 1] * x[k:k + 1, :]
                s = s + jnp.sum(y, axis=1, keepdims=True)
                ss = ss + jnp.sum(y * y, axis=1, keepdims=True)

        acc_ref[:, 0:1] += s
        acc_ref[:, 1:2] += ss

        @pl.when(j == pl.num_programs(1) - 1)
        def _flush():
            stats_ref[...] = acc_ref[...]

    return kernel


# --------------------------------------------------------------------------
# Kernel 2: recompute y = w^T @ x, apply BN scale/shift + LeakyReLU(0.2), store.
# --------------------------------------------------------------------------
def _make_apply_kernel(use_mxu, tl, chunk):
    def kernel(x_ref, w_ref, scale_ref, shift_ref, o_ref):
        # x_ref: [Cin, TL]; w_ref: [CK, Cin]; scale/shift: [CK, 1]; o_ref: [CK, TL]
        if use_mxu:
            y = jnp.dot(w_ref[...].astype(jnp.bfloat16),
                        x_ref[...].astype(jnp.bfloat16),
                        preferred_element_type=jnp.float32)
            v = y * scale_ref[...] + shift_ref[...]
            o_ref[...] = jnp.maximum(v, 0.2 * v)
        else:
            w = w_ref[...]
            scale = scale_ref[...]
            shift = shift_ref[...]
            cin = x_ref.shape[0]
            for c0 in range(0, tl, chunk):
                x = x_ref[:, c0:c0 + chunk]
                y = w[:, 0:1] * x[0:1, :]
                for k in range(1, cin):
                    y = y + w[:, k:k + 1] * x[k:k + 1, :]
                v = y * scale + shift
                o_ref[:, c0:c0 + chunk] = jnp.maximum(v, 0.2 * v)

    return kernel


# --------------------------------------------------------------------------
# Wrapper
# --------------------------------------------------------------------------
def deconv_block_forward(x_nchw, weight, bias, gamma, beta, eps=1e-5, ks=2, stride=2):
    """x_nchw: [N, Cin, H, W]; weight: [Cin, Cout, ks, ks] (PyTorch ConvTranspose2d layout)."""
    assert ks == 2 and stride == 2, "kernel specialised for ks=stride=2, pad=0"
    N, Cin, H, W = x_nchw.shape
    Cout = weight.shape[1]
    KK = ks * ks
    CK = Cout * KK
    HW = H * W

    vmem_limit, tile_budget, vpu_max_cin = _tpu_params()
    use_mxu = Cin > vpu_max_cin

    # Pad the flattened spatial extent up to a multiple of 128 so the budgeted lane-tile
    # path always applies (real InversionNet stages hit HW like 70x70).  Zero columns
    # contribute 0 to the BN sums and the count below uses the true HW.
    HWp = ((HW + 127) // 128) * 128
    x3 = x_nchw.reshape(N, Cin, HW)
    if HWp != HW:
        x3 = jnp.pad(x3, ((0, 0), (0, 0), (0, HWp - HW)))

    tl = _pick_lane_tile(HWp, CK, Cin, tile_budget)
    chunk = _pick_chunk(tl)
    n_j = HWp // tl
    grid = (N, n_j)
    # TODO(synk): when N == 1 on v7x (2 TensorCores), lead the grid with a >=2-way
    #             parallel split (spatial or CK) so both cores get work.

    w_t = jnp.transpose(weight.reshape(Cin, CK))       # [CK, Cin], tiny
    del bias  # per-channel bias before train-mode BN is exactly cancelled by the mean subtraction

    # ---- kernel 1: BN partial statistics only (no y materialisation) --------
    stats = pl.pallas_call(
        _make_stats_kernel(use_mxu, tl, chunk),
        out_shape=jax.ShapeDtypeStruct((N, CK, 2), jnp.float32),
        grid_spec=pltpu.PrefetchScalarGridSpec(
            num_scalar_prefetch=0,
            grid=grid,
            in_specs=[
                pl.BlockSpec((None, Cin, tl), lambda n, j: (n, 0, j)),
                pl.BlockSpec((CK, Cin), lambda n, j: (0, 0)),
            ],
            out_specs=pl.BlockSpec((None, CK, 2), lambda n, j: (n, 0, 0)),
            scratch_shapes=[pltpu.VMEM((CK, 2), jnp.float32)],
        ),
        compiler_params=pltpu.CompilerParams(
            dimension_semantics=("parallel", "arbitrary"),
            vmem_limit_bytes=vmem_limit),
    )(x3, w_t)

    # ---- tiny XLA glue: fold stats into per-row scale/shift -----------------
    count = float(N * HW * KK)                         # true element count per channel
    s = jnp.sum(stats, axis=0).reshape(Cout, KK, 2).sum(axis=1)   # [Cout, 2]
    mean = s[:, 0] / count
    var = jnp.maximum(s[:, 1] / count - mean * mean, 0.0)
    scale_c = gamma / jnp.sqrt(var + eps)              # [Cout]
    shift_c = beta - mean * scale_c
    scale_ck = jnp.repeat(scale_c, KK).reshape(CK, 1)
    shift_ck = jnp.repeat(shift_c, KK).reshape(CK, 1)

    # ---- kernel 2: recompute deconv + BN apply + LeakyReLU (lane-dense out) --
    out2 = pl.pallas_call(
        _make_apply_kernel(use_mxu, tl, chunk),
        out_shape=jax.ShapeDtypeStruct((N, CK, HWp), jnp.float32),
        grid_spec=pltpu.PrefetchScalarGridSpec(
            num_scalar_prefetch=0,
            grid=grid,
            in_specs=[
                pl.BlockSpec((None, Cin, tl), lambda n, j: (n, 0, j)),
                pl.BlockSpec((CK, Cin), lambda n, j: (0, 0)),
                pl.BlockSpec((CK, 1), lambda n, j: (0, 0)),
                pl.BlockSpec((CK, 1), lambda n, j: (0, 0)),
            ],
            out_specs=pl.BlockSpec((None, CK, tl), lambda n, j: (n, 0, j)),
        ),
        compiler_params=pltpu.CompilerParams(
            dimension_semantics=("parallel", "parallel"),
            vmem_limit_bytes=vmem_limit),
    )(x3, w_t, scale_ck, shift_ck)

    # ---- scatter the 2x2 sub-blocks into NCHW (single XLA relayout; strips padding) ---
    out2 = out2[:, :, :HW]
    out = out2.reshape(N, Cout, ks, ks, H, W)
    out = jnp.transpose(out, (0, 1, 4, 2, 5, 3)).reshape(N, Cout, H * ks, W * ks)
    return out


# --------------------------------------------------------------------------
# Pure-JAX reference (same math as PyTorch DeconvBlock in train() mode)
# --------------------------------------------------------------------------
def reference_forward(x, weight, bias, gamma, beta, eps=1e-5, ks=2):
    N, Cin, H, W = x.shape
    Cout = weight.shape[1]
    # transposed conv, stride=2, ks=2, pad=0 -> non-overlapping 2x2 blocks
    y = jnp.einsum('ncij,ckab->nkiajb', x, weight)            # [N,Cout,H,2,W,2]
    y = y.reshape(N, Cout, H * ks, W * ks) + bias[None, :, None, None]
    mean = jnp.mean(y, axis=(0, 2, 3), keepdims=True)
    var = jnp.mean(jnp.square(y - mean), axis=(0, 2, 3), keepdims=True)
    y = (y - mean) / jnp.sqrt(var + eps)
    y = y * gamma[None, :, None, None] + beta[None, :, None, None]
    return jnp.where(y >= 0.0, y, 0.2 * y)


if __name__ == "__main__":
    key = jax.random.PRNGKey(0)
    k1, k2, k3, k4, k5 = jax.random.split(key, 5)

    # small shapes consistent with DeconvBlock(in_f=4, out_f=8, ks=2, stride=2)
    N, Cin, H, W = 2, 4, 16, 16
    Cout, ks = 8, 2

    x = jax.random.normal(k1, (N, Cin, H, W), dtype=jnp.float32)
    weight = jax.random.normal(k2, (Cin, Cout, ks, ks), dtype=jnp.float32) * 0.1
    bias = jax.random.normal(k3, (Cout,), dtype=jnp.float32) * 0.1
    gamma = 1.0 + 0.1 * jax.random.normal(k4, (Cout,), dtype=jnp.float32)
    beta = 0.1 * jax.random.normal(k5, (Cout,), dtype=jnp.float32)

    out = deconv_block_forward(x, weight, bias, gamma, beta)
    out = jax.block_until_ready(out)

    ref = reference_forward(x, weight, bias, gamma, beta)
    assert out.shape == (N, Cout, H * 2, W * 2)
    assert jnp.allclose(out, ref, atol=1e-4, rtol=1e-4), "mismatch vs reference"

    print("KERNEL_OK")
</pallas_src>

<mosaic_0001>
module attributes {stable_mosaic.version = 11 : i64} {
  func.func @kernel(%arg0: i32, %arg1: i32, %arg2: memref<1x4x256xf32, #tpu.memory_space<vmem>>, %arg3: memref<32x4xf32, #tpu.memory_space<vmem>>, %arg4: memref<1x32x2xf32, #tpu.memory_space<vmem>>, %arg5: memref<32x2xf32, #tpu.memory_space<vmem>>) attributes {dimension_semantics = [#tpu.dimension_semantics<parallel>, #tpu.dimension_semantics<arbitrary>], iteration_bounds = array<i64: 2, 1>, scalar_prefetch = 0 : i64, scratch_operands = 1 : i64, tpu.core_type = #tpu.core_type<tc>, window_params = [{transform_indices = @transform_0, window_bounds = array<i64: 1, 4, 256>}, {pipeline_mode = #tpu.pipeline_mode<synchronous>, transform_indices = @transform_1, window_bounds = array<i64: 32, 4>}, {transform_indices = @transform_2, window_bounds = array<i64: 1, 32, 2>}]} {
    %c0_i32 = arith.constant 0 : i32
    %0 = arith.cmpi eq, %arg1, %c0_i32 : i32
    %1 = arith.extui %0 : i1 to i32
    %c0_i32_0 = arith.constant 0 : i32
    %2 = arith.cmpi ne, %1, %c0_i32_0 : i32
    scf.if %2 {
      %cst_17 = arith.constant 0.000000e+00 : f32
      %47 = vector.broadcast %cst_17 : f32 to vector<32x2xf32>
      %c0_18 = arith.constant 0 : index
      %c0_19 = arith.constant 0 : index
      %48 = vector.load %arg5[%c0_18, %c0_19] : memref<32x2xf32, #tpu.memory_space<vmem>>, vector<32x2xf32>
      tpu.vector_store %arg5[%c0_18, %c0_19], %47 {strides = array<i32>} : memref<32x2xf32, #tpu.memory_space<vmem>>, vector<32x2xf32>,
    } else {
    }
    %c0 = arith.constant 0 : index
    %c0_1 = arith.constant 0 : index
    %3 = vector.load %arg3[%c0, %c0_1] : memref<32x4xf32, #tpu.memory_space<vmem>>, vector<32x4xf32>
    %cst = arith.constant 0.000000e+00 : f32
    %4 = vector.broadcast %cst : f32 to vector<32x1xf32>
    %cst_2 = arith.constant 0.000000e+00 : f32
    %5 = vector.broadcast %cst_2 : f32 to vector<32x1xf32>
    %c0_3 = arith.constant 0 : index
    %c0_4 = arith.constant 0 : index
    %c0_5 = arith.constant 0 : index
    %6 = vector.load %arg2[%c0_3, %c0_4, %c0_5] : memref<1x4x256xf32, #tpu.memory_space<vmem>>, vector<1x4x256xf32>
    %7 = vector.shape_cast %6 : vector<1x4x256xf32> to vector<4x256xf32>
    %8 = vector.extract_strided_slice %3 {offsets = [0, 0], sizes = [32, 1], strides = [1, 1]} : vector<32x4xf32> to vector<32x1xf32>
    %9 = vector.extract_strided_slice %7 {offsets = [0, 0], sizes = [1, 256], strides = [1, 1]} : vector<4x256xf32> to vector<1x256xf32>
    %10 = vector.broadcast %8 : vector<32x1xf32> to vector<32x256xf32>
    %11 = vector.broadcast %9 : vector<1x256xf32> to vector<32x256xf32>
    %12 = arith.mulf %10, %11 : vector<32x256xf32>
    %13 = vector.extract_strided_slice %3 {offsets = [0, 1], sizes = [32, 1], strides = [1, 1]} : vector<32x4xf32> to vector<32x1xf32>
    %14 = vector.extract_strided_slice %7 {offsets = [1, 0], sizes = [1, 256], strides = [1, 1]} : vector<4x256xf32> to vector<1x256xf32>
    %15 = vector.broadcast %13 : vector<32x1xf32> to vector<32x256xf32>
    %16 = vector.broadcast %14 : vector<1x256xf32> to vector<32x256xf32>
    %17 = arith.mulf %15, %16 : vector<32x256xf32>
    %18 = arith.addf %12, %17 : vector<32x256xf32>
    %19 = vector.extract_strided_slice %3 {offsets = [0, 2], sizes = [32, 1], strides = [1, 1]} : vector<32x4xf32> to vector<32x1xf32>
    %20 = vector.extract_strided_slice %7 {offsets = [2, 0], sizes = [1, 256], strides = [1, 1]} : vector<4x256xf32> to vector<1x256xf32>
    %21 = vector.broadcast %19 : vector<32x1xf32> to vector<32x256xf32>
    %22 = vector.broadcast %20 : vector<1x256xf32> to vector<32x256xf32>
    %23 = arith.mulf %21, %22 : vector<32x256xf32>
    %24 = arith.addf %18, %23 : vector<32x256xf32>
    %25 = vector.extract_strided_slice %3 {offsets = [0, 3], sizes = [32, 1], strides = [1, 1]} : vector<32x4xf32> to vector<32x1xf32>
    %26 = vector.extract_strided_slice %7 {offsets = [3, 0], sizes = [1, 256], strides = [1, 1]} : vector<4x256xf32> to vector<1x256xf32>
    %27 = vector.broadcast %25 : vector<32x1xf32> to vector<32x256xf32>
    %28 = vector.broadcast %26 : vector<1x256xf32> to vector<32x256xf32>
    %29 = arith.mulf %27, %28 : vector<32x256xf32>
    %30 = arith.addf %24, %29 : vector<32x256xf32>
    %cst_6 = arith.constant dense<0.000000e+00> : vector<32xf32>
    %31 = vector.multi_reduction <add>, %30, %cst_6 [1] : vector<32x256xf32> to vector<32xf32>
    %32 = vector.shape_cast %31 : vector<32xf32> to vector<32x1xf32>
    %33 = arith.addf %4, %32 : vector<32x1xf32>
    %34 = arith.mulf %30, %30 : vector<32x256xf32>
    %cst_7 = arith.constant dense<0.000000e+00> : vector<32xf32>
    %35 = vector.multi_reduction <add>, %34, %cst_7 [1] : vector<32x256xf32> to vector<32xf32>
    %36 = vector.shape_cast %35 : vector<32xf32> to vector<32x1xf32>
    %37 = arith.addf %5, %36 : vector<32x1xf32>
    %c0_8 = arith.constant 0 : index
    %c0_9 = arith.constant 0 : index
    %38 = vector.load %arg5[%c0_8, %c0_9] : memref<32x2xf32, #tpu.memory_space<vmem>>, vector<32x1xf32>
    %39 = arith.addf %38, %33 : vector<32x1xf32>
    %c0_10 = arith.constant 0 : index
    %c0_11 = arith.constant 0 : index
    %40 = vector.load %arg5[%c0_10, %c0_11] : memref<32x2xf32, #tpu.memory_space<vmem>>, vector<32x1xf32>
    tpu.vector_store %arg5[%c0_10, %c0_11], %39 {strides = array<i32>} : memref<32x2xf32, #tpu.memory_space<vmem>>, vector<32x1xf32>,
    %c0_12 = arith.constant 0 : index
    %c1 = arith.constant 1 : index
    %41 = vector.load %arg5[%c0_12, %c1] : memref<32x2xf32, #tpu.memory_space<vmem>>, vector<32x1xf32>
    %42 = arith.addf %41, %37 : vector<32x1xf32>
    %c0_13 = arith.constant 0 : index
    %c1_14 = arith.constant 1 : index
    %43 = vector.load %arg5[%c0_13, %c1_14] : memref<32x2xf32, #tpu.memory_space<vmem>>, vector<32x1xf32>
    tpu.vector_store %arg5[%c0_13, %c1_14], %42 {strides = array<i32>} : memref<32x2xf32, #tpu.memory_space<vmem>>, vector<32x1xf32>,
    %c0_i32_15 = arith.constant 0 : i32
    %44 = arith.cmpi eq, %arg1, %c0_i32_15 : i32
    %45 = arith.extui %44 : i1 to i32
    %c0_i32_16 = arith.constant 0 : i32
    %46 = arith.cmpi ne, %45, %c0_i32_16 : i32
    scf.if %46 {
      %c0_17 = arith.constant 0 : index
      %c0_18 = arith.constant 0 : index
      %47 = vector.load %arg5[%c0_17, %c0_18] : memref<32x2xf32, #tpu.memory_space<vmem>>, vector<32x2xf32>
      %c0_19 = arith.constant 0 : index
      %c0_20 = arith.constant 0 : index
      %c0_21 = arith.constant 0 : index
      %48 = vector.load %arg4[%c0_19, %c0_20, %c0_21] : memref<1x32x2xf32, #tpu.memory_space<vmem>>, vector<1x32x2xf32>
      %49 = vector.shape_cast %48 : vector<1x32x2xf32> to vector<32x2xf32>
      %50 = vector.shape_cast %47 : vector<32x2xf32> to vector<1x32x2xf32>
      tpu.vector_store %arg4[%c0_19, %c0_20, %c0_21], %50 {strides = array<i32>} : memref<1x32x2xf32, #tpu.memory_space<vmem>>, vector<1x32x2xf32>,
    } else {
    }
    return
  }
  func.func @transform_0(%arg0: i32, %arg1: i32) -> (i32, i32, i32) {
    %c0_i32 = arith.constant 0 : i32
    %c0_i32_0 = arith.constant 0 : i32
    return %arg0, %c0_i32, %arg1 : i32, i32, i32
  }
  func.func @transform_1(%arg0: i32, %arg1: i32) -> (i32, i32) {
    %c0_i32 = arith.constant 0 : i32
    %c0_i32_0 = arith.constant 0 : i32
    %c0_i32_1 = arith.constant 0 : i32
    return %c0_i32, %c0_i32_0 : i32, i32
  }
  func.func @transform_2(%arg0: i32, %arg1: i32) -> (i32, i32, i32) {
    %c0_i32 = arith.constant 0 : i32
    %c0_i32_0 = arith.constant 0 : i32
    %c0_i32_1 = arith.constant 0 : i32
    return %arg0, %c0_i32, %c0_i32_0 : i32, i32, i32
  }
}

</mosaic_0001>

<llo_original>
// kernel: tpu_custom_call.1
$region0: #{tpu_custom_call.1}
  #allocation0 [shape = 'u32[]', space=smem, size = 0x4, offset = 0x4, fixed_abs, tag = 'smem constant byte address 0x4 - core index']
  #allocation1 [shape = 'u32[72,128]{1,0:T(1,128)}', space=vmem, size = 0x9000, scoped, tag = 'internal scratch']
  #allocation2 [shape = 'f32[32,2]{1,0:T(8,128)}', space=vmem, size = 0x4000, scoped, tag = 'scratch operand']
  %s0 = inlined_call_operand.vmem [shape: f32[2,4,256], index: 0, kind: input, shape index: {}]
  %s1 = inlined_call_operand.vmem [shape: f32[32,4], index: 1, kind: input, shape index: {}]
  %s2 = inlined_call_operand.vmem [shape: f32[2,32,2], index: 2, kind: output, shape index: {}]
  %s3 = sld [smem:[#allocation0]]
  $region49: #{tpu_custom_call.1} parent=0
    _
  %s5 = ssub.s32 1, %s3
  %s6 = scalar_select 0, %s5, %s3
  loop: start=0, step=1, limit=4
  $region2: #{tpu_custom_call.1} parent=0 // loop_pre_header
    _
  $region3: #{tpu_custom_call.1} parent=0 // loop_header
    %s8 = sphi 0, %s12
    %p9 = scmp.ge.s32.totalorder %s8, 4
    %s15 = sphi 0, %s27
    %s16 = sphi 0, %s23
    %s17 = sphi 0, %s15
    %s18 = sphi 0, %s16
    %s19 = sphi 0, %s17
    %s20 = sphi 0, %s18
    %s32 = sphi 0, %s34
    %s35 = sphi 0, %s32
    %s36 = sphi 0, %s35
    %s52 = sphi 0, %s36
    %s56 = sphi 0, %s56
    %s58 = sphi 0, %s56
    %s59 = sphi 0, %s58
    %s73 = sphi 0, %s59
    %s79 = sphi 0, %s81
    %s82 = sphi 0, %s79
    %s83 = sphi 0, %s82
    %s99 = sphi 0, %s83
  $region4: #{tpu_custom_call.1} parent=0 // loop_header_branch
    %11 = sbr.rel (%p9) target = $region8
  $region5: #{tpu_custom_call.1} parent=0 // loop_body
    %s13 = ssub.s32 %s8, 1
    %s14 = ssub.s32 %s8, 2
    %s21 = sadd.s32 1, %s16
    %p22 = scmp.ge.s32.totalorder %s21, 1
    %s23 = scalar_select %p22, 0, %s21
    %s24 = sadd.s32 1, %s15
    %s25 = scalar_select %p22, %s24, %s15
    %p26 = scmp.ge.s32.totalorder %s25, 2
    %s27 = scalar_select %p26, 0, %s25
    %s28 = ssub.s32 %s15, %s27
    %s29 = ssub.s32 %s16, %s23
    %s30 = sor.u32 %s28, %s29
    %p31 = scmp.eq.s32.totalorder %s30, 0
    %s33 = sadd.s32 %s32, 1
    %s34 = scalar_select %p31, %s32, %s33
    %p37 = pneg %p31
    %p38 = scmp.eq.s32.totalorder %s8, 1
    %p39 = por %p37, %p38
    %p40 = scmp.ne.s32.totalorder %s32, %s35
    %p41 = scmp.eq.s32.totalorder %s8, 0
    %p42 = por %p40, %p41
    %p43 = scmp.ne.s32.totalorder %s32, %s35
    %p44 = scmp.eq.s32.totalorder %s13, 1
    %p45 = por %p43, %p44
    %p46 = scmp.ne.s32.totalorder %s35, %s36
    %p47 = scmp.eq.s32.totalorder %s13, 0
    %p48 = por %p46, %p47
    %p49 = scmp.ne.s32.totalorder %s35, %s36
    %p50 = scmp.eq.s32.totalorder %s14, 1
    %p51 = por %p49, %p50
    %p53 = scmp.ne.s32.totalorder %s36, %s52
    %p54 = scmp.eq.s32.totalorder %s14, 0
    %p55 = por %p53, %p54
    %s57 = sadd.s32 %s56, 1
    %p60 = scmp.eq.s32.totalorder %s8, 1
    %p61 = scmp.ne.s32.totalorder %s56, %s58
    %p62 = scmp.eq.s32.totalorder %s8, 0
    %p63 = por %p61, %p62
    %p64 = scmp.ne.s32.totalorder %s56, %s58
    %p65 = scmp.eq.s32.totalorder %s13, 1
    %p66 = por %p64, %p65
    %p67 = scmp.ne.s32.totalorder %s58, %s59
    %p68 = scmp.eq.s32.totalorder %s13, 0
    %p69 = por %p67, %p68
    %p70 = scmp.ne.s32.totalorder %s58, %s59
    %p71 = scmp.eq.s32.totalorder %s14, 1
    %p72 = por %p70, %p71
    %p74 = scmp.ne.s32.totalorder %s59, %s73
    %p75 = scmp.eq.s32.totalorder %s14, 0
    %p76 = por %p74, %p75
    %s77 = ssub.s32 %s15, %s27
    %p78 = scmp.eq.s32.totalorder %s77, 0
    %s80 = sadd.s32 %s79, 1
    %s81 = scalar_select %p78, %s79, %s80
    %p84 = pneg %p78
    %p85 = scmp.eq.s32.totalorder %s8, 1
    %p86 = por %p84, %p85
    %p87 = scmp.ne.s32.totalorder %s79, %s82
    %p88 = scmp.eq.s32.totalorder %s8, 0
    %p89 = por %p87, %p88
    %p90 = scmp.ne.s32.totalorder %s79, %s82
    %p91 = scmp.eq.s32.totalorder %s13, 1
    %p92 = por %p90, %p91
    %p93 = scmp.ne.s32.totalorder %s82, %s83
    %p94 = scmp.eq.s32.totalorder %s13, 0
    %p95 = por %p93, %p94
    %p96 = scmp.ne.s32.totalorder %s82, %s83
    %p97 = scmp.eq.s32.totalorder %s14, 1
    %p98 = por %p96, %p97
    %p100 = scmp.ne.s32.totalorder %s83, %s99
    %p101 = scmp.eq.s32.totalorder %s14, 0
    %p102 = por %p100, %p101
    %p103 = scmp.le.s32.totalorder 1, %s8
    %p104 = scmp.lt.s32.totalorder %s8, 3
    %p105 = pnand %p103, %p104
    %p106 = pneg %p105
    // Predicated region
    $region9: #{tpu_custom_call.1} parent=5 // pred_check
      _
    $region10: #{tpu_custom_call.1} parent=5 // pred_check_branch
      %108 = sbr.rel (%p105) target = $region12
    $region11: #{tpu_custom_call.1} parent=5 // pred_region
      %s109 = ssub.s32 %s8, 1
      // Predicated region
      $region13: #{tpu_custom_call.1} parent=11 // pred_check
        %p110 = pneg %p69
      $region14: #{tpu_custom_call.1} parent=11 // pred_check_branch
        %112 = sbr.rel (%p110) target = $region16
      $region15: #{tpu_custom_call.1} parent=11 // pred_region
        _
      $region16: #{tpu_custom_call.1} parent=11 // pred_fallthru
        _
    $region12: #{tpu_custom_call.1} parent=5 // pred_fallthru
      _
    %p113 = scmp.lt.s32.totalorder %s8, 2
    // Predicated region
    $region17: #{tpu_custom_call.1} parent=5 // pred_check
      %p114 = pneg %p113
    $region18: #{tpu_custom_call.1} parent=5 // pred_check_branch
      %116 = sbr.rel (%p114) target = $region20
    $region19: #{tpu_custom_call.1} parent=5 // pred_region
      // Predicated region
      $region21: #{tpu_custom_call.1} parent=19 // pred_check
        %p117 = pneg %p42
      $region22: #{tpu_custom_call.1} parent=19 // pred_check_branch
        %119 = sbr.rel (%p117) target = $region24
      $region23: #{tpu_custom_call.1} parent=19 // pred_region
        %s120 = smul.u32 2, %s16
        %p121 = scmp.lt.s32.totalorder %s15, 1
        %s122 = scalar_select %p121, %s15, 1
        %p123 = scmp.lt.s32.totalorder %s120, 1
        %s124 = scalar_select %p123, %s120, 1
        %s125 = smul.addr %s122, 2
        %s126 = sadd.s32 %s124, %s125
        %s127 = smul.addr %s126, 4
        %s128 = scalar_lea.vmem %s0, %s127
        %s129 = smul.u32 2, %s16
      $region24: #{tpu_custom_call.1} parent=19 // pred_fallthru
        _
    $region20: #{tpu_custom_call.1} parent=5 // pred_fallthru
      _
    %p130 = scmp.le.s32.totalorder 1, %s8
    %p131 = scmp.lt.s32.totalorder %s8, 3
    %p132 = pnand %p130, %p131
    %p133 = pneg %p132
    // Predicated region
    $region25: #{tpu_custom_call.1} parent=5 // pred_check
      _
    $region26: #{tpu_custom_call.1} parent=5 // pred_check_branch
      %135 = sbr.rel (%p132) target = $region28
    $region27: #{tpu_custom_call.1} parent=5 // pred_region
      %s136 = ssub.s32 %s8, 1
      %s137 = smul.u32 2, %s18
      %p138 = scmp.lt.s32.totalorder %s17, 1
      %s139 = scalar_select %p138, %s17, 1
      %p140 = scmp.lt.s32.totalorder %s137, 1
      %s141 = scalar_select %p140, %s137, 1
      %s142 = smul.addr %s139, 2
      %s143 = sadd.s32 %s141, %s142
      %s144 = smul.addr %s143, 4
      %s145 = scalar_lea.vmem %s0, %s144
      %p146 = pneg %p48
      %p147 = pneg %p45
      %p148 = pneg %p69
      %p149 = pneg %p66
      %p150 = pneg %p95
      %p151 = pneg %p92
      %p152 = scmp.lt.s32.totalorder %s17, 1
      %s153 = scalar_select %p152, %s17, 1
      %s154 = smul.addr %s153, 4
      %s155 = smul.addr %s154, 8
      %s156 = scalar_lea.vmem %s2, %s155
      %s157 = smul.u32 2, %s18
      %p158 = scmp.lt.s32.totalorder %s17, 1
      %s159 = scalar_select %p158, %s17, 1
      %p160 = scmp.lt.s32.totalorder %s157, 1
      %s161 = scalar_select %p160, %s157, 1
      %s162 = smul.addr %s159, 2
      %s163 = sadd.s32 %s161, %s162
      %s164 = smul.addr %s163, 4
      %s165 = scalar_lea.vmem %s0, %s164
      %s166 = smul.u32 2, %s18
      %p167 = scmp.lt.s32.totalorder %s17, 1
      %s168 = scalar_select %p167, %s17, 1
      %s169 = smul.addr %s168, 4
      %s170 = smul.addr %s169, 8
      %s171 = scalar_lea.vmem %s2, %s170
      %p172 = scmp.eq.s32.totalorder %s18, 0
      // Predicated region
      $region29: #{tpu_custom_call.1} parent=27 // pred_check
        %p173 = pneg %p172
      $region30: #{tpu_custom_call.1} parent=27 // pred_check_branch
        %175 = sbr.rel (%p173) target = $region32
      $region31: #{tpu_custom_call.1} parent=27 // pred_region
        %vm176 = vcmask 15360
        %177 = vst.msk [vmem:[#allocation2] sm:$0xff] %vm176, 0.0
        %178 = vst.msk [vmem:[#allocation2 + $0x8] sm:$0xff] %vm176, 0.0
        %179 = vst.msk [vmem:[#allocation2 + $0x10] sm:$0xff] %vm176, 0.0
        %180 = vst.msk [vmem:[#allocation2 + $0x18] sm:$0xff] %vm176, 0.0
      $region32: #{tpu_custom_call.1} parent=27 // pred_fallthru
        _
      %v181 = vld [vmem:[%s1] sm:$0xff]
      %v182 = vld [vmem:[%s1 + $0x8] sm:$0xff]
      %v183 = vld [vmem:[%s1 + $0x10] sm:$0xff]
      %v184 = vld [vmem:[%s1 + $0x18] sm:$0xff]
      %v185 = vld [vmem:[%s165] sm:$0xff]
      %187 = vset.pattern.permute.xlu0 0
      %188 = vperm.xlu0 %187, %v181
      %v189 = vpop.permute.xlu0 %188
      %192 = vset.pattern.permute.xlu0 0
      %193 = vperm.xlu0 %192, %v182
      %v194 = vpop.permute.xlu0 %193
      %197 = vset.pattern.permute.xlu0 0
      %198 = vperm.xlu0 %197, %v183
      %v199 = vpop.permute.xlu0 %198
      %202 = vset.pattern.permute.xlu0 0
      %203 = vperm.xlu0 %202, %v184
      %v204 = vpop.permute.xlu0 %203
      %v207 = vperm.slane %v185, 0
      %v208 = vperm.slane %v185, 4
      %v211 = vperm.slane %v207, 0
      %v212 = vperm.slane %v208, 0
      %v213 = vmul.f32 %v189, %v211
      %v214 = vmul.f32 %v189, %v212
      %v215 = vmul.f32 %v194, %v211
      %v216 = vmul.f32 %v194, %v212
      %v217 = vmul.f32 %v199, %v211
      %v218 = vmul.f32 %v199, %v212
      %v219 = vmul.f32 %v204, %v211
      %v220 = vmul.f32 %v204, %v212
      %221 = vset.pattern.permute.xlu0 1
      %222 = vperm.xlu0 %221, %v181
      %v223 = vpop.permute.xlu0 %222
      %225 = vset.pattern.permute.xlu0 1
      %226 = vperm.xlu0 %225, %v182
      %v227 = vpop.permute.xlu0 %226
      %229 = vset.pattern.permute.xlu0 1
      %230 = vperm.xlu0 %229, %v183
      %v231 = vpop.permute.xlu0 %230
      %233 = vset.pattern.permute.xlu0 1
      %234 = vperm.xlu0 %233, %v184
      %v235 = vpop.permute.xlu0 %234
      %v237 = vperm.slane %v185, 1
      %v238 = vperm.slane %v185, 5
      %v241 = vperm.slane %v237, 1
      %v242 = vperm.slane %v238, 1
      %v243 = vmul.f32 %v223, %v241
      %v244 = vmul.f32 %v223, %v242
      %v245 = vmul.f32 %v227, %v241
      %v246 = vmul.f32 %v227, %v242
      %v247 = vmul.f32 %v231, %v241
      %v248 = vmul.f32 %v231, %v242
      %v249 = vmul.f32 %v235, %v241
      %v250 = vmul.f32 %v235, %v242
      %v251 = vadd.f32 %v213, %v243
      %v252 = vadd.f32 %v214, %v244
      %v253 = vadd.f32 %v215, %v245
      %v254 = vadd.f32 %v216, %v246
      %v255 = vadd.f32 %v217, %v247
      %v256 = vadd.f32 %v218, %v248
      %v257 = vadd.f32 %v219, %v249
      %v258 = vadd.f32 %v220, %v250
      %259 = vset.pattern.permute.xlu0 2
      %260 = vperm.xlu0 %259, %v181
      %v261 = vpop.permute.xlu0 %260
      %263 = vset.pattern.permute.xlu0 2
      %264 = vperm.xlu0 %263, %v182
      %v265 = vpop.permute.xlu0 %264
      %267 = vset.pattern.permute.xlu0 2
      %268 = vperm.xlu0 %267, %v183
      %v269 = vpop.permute.xlu0 %268
      %271 = vset.pattern.permute.xlu0 2
      %272 = vperm.xlu0 %271, %v184
      %v273 = vpop.permute.xlu0 %272
      %v275 = vperm.slane %v185, 2
      %v276 = vperm.slane %v185, 6
      %v279 = vperm.slane %v275, 2
      %v280 = vperm.slane %v276, 2
      %v281 = vmul.f32 %v261, %v279
      %v282 = vmul.f32 %v261, %v280
      %v283 = vmul.f32 %v265, %v279
      %v284 = vmul.f32 %v265, %v280
      %v285 = vmul.f32 %v269, %v279
      %v286 = vmul.f32 %v269, %v280
      %v287 = vmul.f32 %v273, %v279
      %v288 = vmul.f32 %v273, %v280
      %v289 = vadd.f32 %v251, %v281
      %v290 = vadd.f32 %v252, %v282
      %v291 = vadd.f32 %v253, %v283
      %v292 = vadd.f32 %v254, %v284
      %v293 = vadd.f32 %v255, %v285
      %v294 = vadd.f32 %v256, %v286
      %v295 = vadd.f32 %v257, %v287
      %v296 = vadd.f32 %v258, %v288
      %297 = vset.pattern.permute.xlu0 3
      %298 = vperm.xlu0 %297, %v181
      %v299 = vpop.permute.xlu0 %298
      %301 = vset.pattern.permute.xlu0 3
      %302 = vperm.xlu0 %301, %v182
      %v303 = vpop.permute.xlu0 %302
      %305 = vset.pattern.permute.xlu0 3
      %306 = vperm.xlu0 %305, %v183
      %v307 = vpop.permute.xlu0 %306
      %309 = vset.pattern.permute.xlu0 3
      %310 = vperm.xlu0 %309, %v184
      %v311 = vpop.permute.xlu0 %310
      %v313 = vperm.slane %v185, 3
      %v314 = vperm.slane %v185, 7
      %v317 = vperm.slane %v313, 3
      %v318 = vperm.slane %v314, 3
      %v319 = vmul.f32 %v299, %v317
      %v320 = vmul.f32 %v299, %v318
      %v321 = vmul.f32 %v303, %v317
      %v322 = vmul.f32 %v303, %v318
      %v323 = vmul.f32 %v307, %v317
      %v324 = vmul.f32 %v307, %v318
      %v325 = vmul.f32 %v311, %v317
      %v326 = vmul.f32 %v311, %v318
      %v327 = vadd.f32 %v289, %v319
      %v328 = vadd.f32 %v290, %v320
      %v329 = vadd.f32 %v291, %v321
      %v330 = vadd.f32 %v292, %v322
      %v331 = vadd.f32 %v293, %v323
      %v332 = vadd.f32 %v294, %v324
      %v333 = vadd.f32 %v295, %v325
      %v334 = vadd.f32 %v296, %v326
      %v335 = vadd.f32 %v327, %v328
      %336 = vadd.xlane.f32.xlu0 %v335
      %v337 = vpop.xlane.xlu0 %336
      %v338 = vadd.f32 %v329, %v330
      %339 = vadd.xlane.f32.xlu0 %v338
      %v340 = vpop.xlane.xlu0 %339
      %v341 = vadd.f32 %v331, %v332
      %342 = vadd.xlane.f32.xlu0 %v341
      %v343 = vpop.xlane.xlu0 %342
      %v344 = vadd.f32 %v333, %v334
      %345 = vadd.xlane.f32.xlu0 %v344
      %v346 = vpop.xlane.xlu0 %345
      %v347 = vadd.f32 %v337, 0.0
      %v348 = vadd.f32 %v340, 0.0
      %v349 = vadd.f32 %v343, 0.0
      %v350 = vadd.f32 %v346, 0.0
      %v351 = vmul.f32 %v327, %v327
      %v352 = vmul.f32 %v328, %v328
      %v353 = vmul.f32 %v329, %v329
      %v354 = vmul.f32 %v330, %v330
      %v355 = vmul.f32 %v331, %v331
      %v356 = vmul.f32 %v332, %v332
      %v357 = vmul.f32 %v333, %v333
      %v358 = vmul.f32 %v334, %v334
      %v359 = vadd.f32 %v351, %v352
      %360 = vadd.xlane.f32.xlu0 %v359
      %v361 = vpop.xlane.xlu0 %360
      %v362 = vadd.f32 %v353, %v354
      %363 = vadd.xlane.f32.xlu0 %v362
      %v364 = vpop.xlane.xlu0 %363
      %v365 = vadd.f32 %v355, %v356
      %366 = vadd.xlane.f32.xlu0 %v365
      %v367 = vpop.xlane.xlu0 %366
      %v368 = vadd.f32 %v357, %v358
      %369 = vadd.xlane.f32.xlu0 %v368
      %v370 = vpop.xlane.xlu0 %369
      %v371 = vadd.f32 %v361, 0.0
      %v372 = vadd.f32 %v364, 0.0
      %v373 = vadd.f32 %v367, 0.0
      %v374 = vadd.f32 %v370, 0.0
      %v375 = vld [vmem:[#allocation2] sm:$0xff]
      %v376 = vld [vmem:[#allocation2 + $0x8] sm:$0xff]
      %v377 = vld [vmem:[#allocation2 + $0x10] sm:$0xff]
      %v378 = vld [vmem:[#allocation2 + $0x18] sm:$0xff]
      %v379 = vadd.f32 %v375, %v347
      %v380 = vadd.f32 %v376, %v348
      %v381 = vadd.f32 %v377, %v349
      %v382 = vadd.f32 %v378, %v350
      %vm383 = vcmask 7168
      %384 = vst.msk [vmem:[#allocation2] sm:$0xff] %vm383, %v379
      %385 = vst.msk [vmem:[#allocation2 + $0x8] sm:$0xff] %vm383, %v380
      %386 = vst.msk [vmem:[#allocation2 + $0x10] sm:$0xff] %vm383, %v381
      %387 = vst.msk [vmem:[#allocation2 + $0x18] sm:$0xff] %vm383, %v382
      %v388 = vld [vmem:[#allocation2] sm:$0xff]
      %v389 = vld [vmem:[#allocation2 + $0x8] sm:$0xff]
      %v390 = vld [vmem:[#allocation2 + $0x10] sm:$0xff]
      %v391 = vld [vmem:[#allocation2 + $0x18] sm:$0xff]
      %v392 = vadd.f32 %v388, %v371
      %v393 = vadd.f32 %v389, %v372
      %v394 = vadd.f32 %v390, %v373
      %v395 = vadd.f32 %v391, %v374
      %vm396 = vcmask 15368
      %397 = vst.msk [vmem:[#allocation2] sm:$0xff] %vm396, %v392
      %398 = vst.msk [vmem:[#allocation2 + $0x8] sm:$0xff] %vm396, %v393
      %399 = vst.msk [vmem:[#allocation2 + $0x10] sm:$0xff] %vm396, %v394
      %400 = vst.msk [vmem:[#allocation2 + $0x18] sm:$0xff] %vm396, %v395
      // Predicated region
      $region33: #{tpu_custom_call.1} parent=27 // pred_check
        %p401 = pneg %p172
      $region34: #{tpu_custom_call.1} parent=27 // pred_check_branch
        %403 = sbr.rel (%p401) target = $region36
      $region35: #{tpu_custom_call.1} parent=27 // pred_region
        %v404 = vld [vmem:[#allocation2] sm:$0xff]
        %v405 = vld [vmem:[#allocation2 + $0x8] sm:$0xff]
        %v406 = vld [vmem:[#allocation2 + $0x10] sm:$0xff]
        %v407 = vld [vmem:[#allocation2 + $0x18] sm:$0xff]
        %vm408 = vcmask 15360
        %409 = vst.msk [vmem:[%s171] sm:$0xff] %vm408, %v404
        %410 = vst.msk [vmem:[%s171 + $0x8] sm:$0xff] %vm408, %v405
        %411 = vst.msk [vmem:[%s171 + $0x10] sm:$0xff] %vm408, %v406
        %412 = vst.msk [vmem:[%s171 + $0x18] sm:$0xff] %vm408, %v407
      $region36: #{tpu_custom_call.1} parent=27 // pred_fallthru
        _
      %p413 = scmp.lt.s32.totalorder %s17, 1
      %s414 = scalar_select %p413, %s17, 1
      %s415 = smul.addr %s414, 4
      %s416 = smul.addr %s415, 8
      %s417 = scalar_lea.vmem %s2, %s416
      // Predicated region
      $region37: #{tpu_custom_call.1} parent=27 // pred_check
        %p418 = pneg %p92
      $region38: #{tpu_custom_call.1} parent=27 // pred_check_branch
        %420 = sbr.rel (%p418) target = $region40
      $region39: #{tpu_custom_call.1} parent=27 // pred_region
        _
      $region40: #{tpu_custom_call.1} parent=27 // pred_fallthru
        _
    $region28: #{tpu_custom_call.1} parent=5 // pred_fallthru
      _
    %p421 = scmp.le.s32.totalorder 2, %s8
    // Predicated region
    $region41: #{tpu_custom_call.1} parent=5 // pred_check
      %p422 = pneg %p421
    $region42: #{tpu_custom_call.1} parent=5 // pred_check_branch
      %424 = sbr.rel (%p422) target = $region44
    $region43: #{tpu_custom_call.1} parent=5 // pred_region
      %s425 = ssub.s32 %s8, 2
      // Predicated region
      $region45: #{tpu_custom_call.1} parent=43 // pred_check
        %p426 = pneg %p98
      $region46: #{tpu_custom_call.1} parent=43 // pred_check_branch
        %428 = sbr.rel (%p426) target = $region48
      $region47: #{tpu_custom_call.1} parent=43 // pred_region
        %p429 = scmp.lt.s32.totalorder %s19, 1
        %s430 = scalar_select %p429, %s19, 1
        %s431 = smul.addr %s430, 4
        %s432 = smul.addr %s431, 8
        %s433 = scalar_lea.vmem %s2, %s432
      $region48: #{tpu_custom_call.1} parent=43 // pred_fallthru
        _
    $region44: #{tpu_custom_call.1} parent=5 // pred_fallthru
      _
  $region6: #{tpu_custom_call.1} parent=0 // loop_footer
    %s12 = sadd.s32 1, %s8
  $region7: #{tpu_custom_call.1} parent=0 // loop_footer_branch
    %7 = sbr.rel target = $region3
  $region8: #{tpu_custom_call.1} parent=0 // loop_exit
    _

</llo_original>
